<compile_context>
chip_gen: v7x
topology: tpu7x:2x2x1
jax: 0.10.0
libtpu: 0.0.40
codegen_flags: <defaults>
</compile_context>

<pallas_src>
import functools

import jax
import jax.numpy as jnp
from jax.experimental import pallas as pl
from jax.experimental.pallas import tpu as pltpu

NUM_LAYERS = 10
PAD = 128            # lane-padded feature width used inside the kernel
ONES_LANE = PAD - 1  # spare lane carrying a constant 1.0 (bias fold)
SUBLANE = 8          # batch padding granularity
MAX_TB = 2048        # max batch-tile rows (fewer/bigger tiles beat 0.35us/step)
SPLIT_MIN_B = 512    # above this batch, force an even tile count (v7x 2 TCs)


def _round_up(n, m):
    return ((n + m - 1) // m) * m


def _cdiv(a, b):
    return (a + b - 1) // b


def _dqn_kernel(x_ref, w_ref, o_ref, xp_ref, *, inputs, outputs):
    """Runs the whole 10-layer MLP on one batch tile.

    x_ref : (TB, inputs)         narrow bf16 input activations
    w_ref : (10, 128, 128) bf16  padded transposed weights (in, out); row 127
                                 of each layer holds the bias, and
                                 W[l][127,127] == 1 so the ones-lane propagates
    o_ref : (TB, outputs) f32    narrow output block
    xp_ref: (TB, 128) bf16       VMEM scratch for the lane-padded activations
    """
    # Build the padded first-layer activation in VMEM:
    #   lanes [0, inputs)   <- real inputs
    #   lane  ONES_LANE     <- 1.0   (bias carrier)
    #   everything else     <- 0.0
    lane = jax.lax.broadcasted_iota(jnp.int32, xp_ref.shape, 1)
    xp_ref[...] = jnp.where(lane == ONES_LANE, 1.0, 0.0).astype(xp_ref.dtype)
    xp_ref[:, :inputs] = x_ref[...]
    h = xp_ref[...]                                   # (TB, 128) bf16

    # Static unroll over the 10 layers (fixed trip count -> full LLO
    # scheduler visibility; each layer's relu+cast overlaps the next matmul).
    for l in range(NUM_LAYERS):
        acc = jnp.dot(h, w_ref[l], preferred_element_type=jnp.float32)
        if l < NUM_LAYERS - 1:
            # ReLU on the f32 MXU accumulator, single cast to bf16 for the
            # next matmul (no bf16 elementwise arithmetic -> v5e-safe too).
            h = jnp.maximum(acc, 0.0).astype(jnp.bfloat16)
        else:
            # Final layer: no ReLU; write only the real output lanes.
            o_ref[...] = acc[:, :outputs].astype(o_ref.dtype)


@functools.partial(jax.jit, static_argnames=("inputs", "outputs"))
def dqn_forward(x, w_stack, *, inputs, outputs):
    """x: (B, inputs) float32 -> (B, outputs) float32."""
    B = x.shape[0]

    # B-aware tiling: as few tiles as possible (per-grid-step overhead), but
    # an even count once the batch is big enough so v7x's two TensorCores
    # both get work (harmless one extra ~0.35us step on v5e/v6e).
    num_tiles = max(1, _cdiv(B, MAX_TB))
    if B >= SPLIT_MIN_B and num_tiles % 2 == 1:
        num_tiles += 1
    TB = _round_up(_cdiv(B, num_tiles), SUBLANE)
    Bp = TB * num_tiles

    # Narrow bf16 input; only row-pad (no 128-lane padding in HBM).  The bf16
    # cast is numerically identical to the kernel's old cast-at-MXU-input.
    x_bf = x.astype(jnp.bfloat16)
    if Bp != B:
        x_bf = jnp.pad(x_bf, ((0, Bp - B), (0, 0)))

    kernel = functools.partial(_dqn_kernel, inputs=inputs, outputs=outputs)

    out = pl.pallas_call(
        kernel,
        out_shape=jax.ShapeDtypeStruct((Bp, outputs), jnp.float32),
        grid_spec=pltpu.PrefetchScalarGridSpec(
            num_scalar_prefetch=0,
            grid=(num_tiles,),
            in_specs=[
                # Batch-tiled narrow activations: pipelined across the grid.
                pl.BlockSpec((TB, inputs), lambda i: (i, 0)),
                # Weight stack: constant block index -> fetched once, resident
                # in VMEM (~320 KiB) across all batch tiles.
                pl.BlockSpec((NUM_LAYERS, PAD, PAD), lambda i: (0, 0, 0)),
            ],
            out_specs=pl.BlockSpec((TB, outputs), lambda i: (i, 0)),
            scratch_shapes=[pltpu.VMEM((TB, PAD), jnp.bfloat16)],
        ),
        # VMEM budget (worst case TB=2048): 2x(TB*inputs*2B) in + 2x(TB*outputs*4B)
        # out + 2x 320 KiB weights + 512 KiB scratch + ~1.5 MiB live temporaries
        # ~= 3.5 MiB -> far under the 32 MiB scoped default on v7x (64 MiB phys)
        # and trivially fine on v5e/v6e.  Set vmem_limit_bytes if MAX_TB > ~8192.
        compiler_params=pltpu.CompilerParams(
            dimension_semantics=("parallel",)),
    )(x_bf, w_stack)

    return out if Bp == B else out[:B]


def init_dqn_params(key, inputs, outputs):
    """Deterministic init mirroring nn.Linear default (uniform +-1/sqrt(fan_in)).

    Returns the packed (10,128,128) bf16 weight stack (transposed to (in,out),
    bias folded into row ONES_LANE, W[ONES_LANE,ONES_LANE]=1 so the ones lane
    self-propagates) plus the raw f32 per-layer params for reference checks.
    """
    dims = [inputs, 12, 18, 24, 30, 36, 42, 48, 54, 60, outputs]
    assert max(dims) <= ONES_LANE, "feature widths must leave the ones-lane free"
    w_stack = jnp.zeros((NUM_LAYERS, PAD, PAD), jnp.float32)
    raw = []
    for l in range(NUM_LAYERS):
        fan_in, fan_out = dims[l], dims[l + 1]
        key, kw, kb = jax.random.split(key, 3)
        bound = 1.0 / (fan_in ** 0.5)
        w = jax.random.uniform(kw, (fan_out, fan_in), jnp.float32, -bound, bound)
        b = jax.random.uniform(kb, (fan_out,), jnp.float32, -bound, bound)
        raw.append((w, b))
        # Pack transposed (in, out) so the kernel does x @ W.
        w_stack = w_stack.at[l, :fan_in, :fan_out].set(w.T)
        # Bias fold: ones-lane row carries the bias; diagonal 1 keeps the
        # ones lane alive through every layer (relu(1)=1).
        w_stack = w_stack.at[l, ONES_LANE, :fan_out].set(b)
        w_stack = w_stack.at[l, ONES_LANE, ONES_LANE].set(1.0)
    return w_stack.astype(jnp.bfloat16), raw


def dqn_reference_f32(x, raw_params):
    """Pure f32 reference (exact PyTorch-module semantics)."""
    h = x
    for l, (w, b) in enumerate(raw_params):
        h = h @ w.T + b
        if l < NUM_LAYERS - 1:
            h = jnp.maximum(h, 0.0)
    return h


def dqn_reference_bf16(x, raw_params):
    """Reference mirroring the kernel numerics: bf16 inputs/weights/bias on the
    MXU, f32 accumulation, bf16-carried inter-layer activations."""
    h = x.astype(jnp.bfloat16)
    for l, (w, b) in enumerate(raw_params):
        acc = jnp.dot(h, w.T.astype(jnp.bfloat16),
                      preferred_element_type=jnp.float32)
        acc = acc + b.astype(jnp.bfloat16).astype(jnp.float32)
        if l < NUM_LAYERS - 1:
            h = jnp.maximum(acc, 0.0).astype(jnp.bfloat16)
        else:
            h = acc
    return h


if __name__ == "__main__":
    key = jax.random.PRNGKey(0)
    inputs, outputs = 6, 3          # small DQN state/action space

    kx1, kx2, kp = jax.random.split(key, 3)
    w_stack, raw = init_dqn_params(kp, inputs, outputs)

    # Case 1: tiny serving batch (single grid step).
    x_small = jax.random.normal(kx1, (2, inputs), jnp.float32)
    out_small = jax.block_until_ready(
        dqn_forward(x_small, w_stack, inputs=inputs, outputs=outputs))
    assert out_small.shape == (2, outputs)
    assert jnp.allclose(out_small, dqn_reference_bf16(x_small, raw),
                        atol=5e-3, rtol=5e-3)
    assert jnp.allclose(out_small, dqn_reference_f32(x_small, raw),
                        atol=5e-2, rtol=5e-2)

    # Case 2: larger batch exercising the tiled, pipelined parallel grid
    # (B=600 -> 2 tiles of 304 rows, both v7x TensorCores busy).
    x_big = jax.random.normal(kx2, (600, inputs), jnp.float32)
    out_big = jax.block_until_ready(
        dqn_forward(x_big, w_stack, inputs=inputs, outputs=outputs))
    assert out_big.shape == (600, outputs)
    assert jnp.allclose(out_big, dqn_reference_bf16(x_big, raw),
                        atol=5e-3, rtol=5e-3)
    assert jnp.allclose(out_big, dqn_reference_f32(x_big, raw),
                        atol=5e-2, rtol=5e-2)

    print("KERNEL_OK")
</pallas_src>

<mosaic_0001>
module attributes {stable_mosaic.version = 11 : i64} {
  func.func @_dqn_kernel(%arg0: i32, %arg1: memref<8x6xbf16, #tpu.memory_space<vmem>>, %arg2: memref<10x128x128xbf16, #tpu.memory_space<vmem>>, %arg3: memref<8x3xf32, #tpu.memory_space<vmem>>, %arg4: memref<8x128xbf16, #tpu.memory_space<vmem>>) attributes {dimension_semantics = [#tpu.dimension_semantics<parallel>], iteration_bounds = array<i64: 1>, scalar_prefetch = 0 : i64, scratch_operands = 1 : i64, tpu.core_type = #tpu.core_type<tc>, window_params = [{transform_indices = @transform_0, window_bounds = array<i64: 8, 6>}, {pipeline_mode = #tpu.pipeline_mode<synchronous>, transform_indices = @transform_1, window_bounds = array<i64: 10, 128, 128>}, {transform_indices = @transform_2, window_bounds = array<i64: 8, 3>}]} {
    %0 = tpu.iota {dimensions = array<i32: 1>} : vector<8x128xi32>
    %c127_i32 = arith.constant 127 : i32
    %1 = vector.broadcast %c127_i32 : i32 to vector<8x128xi32>
    %2 = arith.cmpi eq, %0, %1 : vector<8x128xi32>
    %cst = arith.constant 1.000000e+00 : f32
    %cst_0 = arith.constant 0.000000e+00 : f32
    %3 = vector.broadcast %cst : f32 to vector<8x128xf32>
    %4 = vector.broadcast %cst_0 : f32 to vector<8x128xf32>
    %5 = arith.select %2, %3, %4 : vector<8x128xi1>, vector<8x128xf32>
    %6 = arith.truncf %5 : vector<8x128xf32> to vector<8x128xbf16>
    %c0 = arith.constant 0 : index
    %c0_1 = arith.constant 0 : index
    %7 = vector.load %arg4[%c0, %c0_1] : memref<8x128xbf16, #tpu.memory_space<vmem>>, vector<8x128xbf16>
    tpu.vector_store %arg4[%c0, %c0_1], %6 {strides = array<i32>} : memref<8x128xbf16, #tpu.memory_space<vmem>>, vector<8x128xbf16>,
    %c0_2 = arith.constant 0 : index
    %c0_3 = arith.constant 0 : index
    %8 = vector.load %arg1[%c0_2, %c0_3] : memref<8x6xbf16, #tpu.memory_space<vmem>>, vector<8x6xbf16>
    %c0_4 = arith.constant 0 : index
    %c0_5 = arith.constant 0 : index
    %9 = vector.load %arg4[%c0_4, %c0_5] : memref<8x128xbf16, #tpu.memory_space<vmem>>, vector<8x6xbf16>
    tpu.vector_store %arg4[%c0_4, %c0_5], %8 {strides = array<i32>} : memref<8x128xbf16, #tpu.memory_space<vmem>>, vector<8x6xbf16>,
    %c0_6 = arith.constant 0 : index
    %c0_7 = arith.constant 0 : index
    %10 = vector.load %arg4[%c0_6, %c0_7] : memref<8x128xbf16, #tpu.memory_space<vmem>>, vector<8x128xbf16>
    %c0_8 = arith.constant 0 : index
    %c0_9 = arith.constant 0 : index
    %c0_10 = arith.constant 0 : index
    %11 = vector.load %arg2[%c0_8, %c0_9, %c0_10] : memref<10x128x128xbf16, #tpu.memory_space<vmem>>, vector<1x128x128xbf16>
    %12 = vector.shape_cast %11 : vector<1x128x128xbf16> to vector<128x128xbf16>
    %cst_11 = arith.constant dense<0.000000e+00> : vector<8x128xf32>
    %13 = tpu.matmul %10, %12, %cst_11 {dimension_numbers = #tpu.dot_dimension_numbers<[1], [0], [0], [1], [0, 0, 1, 1], [], []>} : vector<8x128xbf16>, vector<128x128xbf16>, vector<8x128xf32> -> vector<8x128xf32>
    %cst_12 = arith.constant 0.000000e+00 : f32
    %14 = vector.broadcast %cst_12 : f32 to vector<8x128xf32>
    %15 = arith.maximumf %13, %14 : vector<8x128xf32>
    %16 = arith.truncf %15 : vector<8x128xf32> to vector<8x128xbf16>
    %c1 = arith.constant 1 : index
    %c0_13 = arith.constant 0 : index
    %c0_14 = arith.constant 0 : index
    %17 = vector.load %arg2[%c1, %c0_13, %c0_14] : memref<10x128x128xbf16, #tpu.memory_space<vmem>>, vector<1x128x128xbf16>
    %18 = vector.shape_cast %17 : vector<1x128x128xbf16> to vector<128x128xbf16>
    %cst_15 = arith.constant dense<0.000000e+00> : vector<8x128xf32>
    %19 = tpu.matmul %16, %18, %cst_15 {dimension_numbers = #tpu.dot_dimension_numbers<[1], [0], [0], [1], [0, 0, 1, 1], [], []>} : vector<8x128xbf16>, vector<128x128xbf16>, vector<8x128xf32> -> vector<8x128xf32>
    %cst_16 = arith.constant 0.000000e+00 : f32
    %20 = vector.broadcast %cst_16 : f32 to vector<8x128xf32>
    %21 = arith.maximumf %19, %20 : vector<8x128xf32>
    %22 = arith.truncf %21 : vector<8x128xf32> to vector<8x128xbf16>
    %c2 = arith.constant 2 : index
    %c0_17 = arith.constant 0 : index
    %c0_18 = arith.constant 0 : index
    %23 = vector.load %arg2[%c2, %c0_17, %c0_18] : memref<10x128x128xbf16, #tpu.memory_space<vmem>>, vector<1x128x128xbf16>
    %24 = vector.shape_cast %23 : vector<1x128x128xbf16> to vector<128x128xbf16>
    %cst_19 = arith.constant dense<0.000000e+00> : vector<8x128xf32>
    %25 = tpu.matmul %22, %24, %cst_19 {dimension_numbers = #tpu.dot_dimension_numbers<[1], [0], [0], [1], [0, 0, 1, 1], [], []>} : vector<8x128xbf16>, vector<128x128xbf16>, vector<8x128xf32> -> vector<8x128xf32>
    %cst_20 = arith.constant 0.000000e+00 : f32
    %26 = vector.broadcast %cst_20 : f32 to vector<8x128xf32>
    %27 = arith.maximumf %25, %26 : vector<8x128xf32>
    %28 = arith.truncf %27 : vector<8x128xf32> to vector<8x128xbf16>
    %c3 = arith.constant 3 : index
    %c0_21 = arith.constant 0 : index
    %c0_22 = arith.constant 0 : index
    %29 = vector.load %arg2[%c3, %c0_21, %c0_22] : memref<10x128x128xbf16, #tpu.memory_space<vmem>>, vector<1x128x128xbf16>
    %30 = vector.shape_cast %29 : vector<1x128x128xbf16> to vector<128x128xbf16>
    %cst_23 = arith.constant dense<0.000000e+00> : vector<8x128xf32>
    %31 = tpu.matmul %28, %30, %cst_23 {dimension_numbers = #tpu.dot_dimension_numbers<[1], [0], [0], [1], [0, 0, 1, 1], [], []>} : vector<8x128xbf16>, vector<128x128xbf16>, vector<8x128xf32> -> vector<8x128xf32>
    %cst_24 = arith.constant 0.000000e+00 : f32
    %32 = vector.broadcast %cst_24 : f32 to vector<8x128xf32>
    %33 = arith.maximumf %31, %32 : vector<8x128xf32>
    %34 = arith.truncf %33 : vector<8x128xf32> to vector<8x128xbf16>
    %c4 = arith.constant 4 : index
    %c0_25 = arith.constant 0 : index
    %c0_26 = arith.constant 0 : index
    %35 = vector.load %arg2[%c4, %c0_25, %c0_26] : memref<10x128x128xbf16, #tpu.memory_space<vmem>>, vector<1x128x128xbf16>
    %36 = vector.shape_cast %35 : vector<1x128x128xbf16> to vector<128x128xbf16>
    %cst_27 = arith.constant dense<0.000000e+00> : vector<8x128xf32>
    %37 = tpu.matmul %34, %36, %cst_27 {dimension_numbers = #tpu.dot_dimension_numbers<[1], [0], [0], [1], [0, 0, 1, 1], [], []>} : vector<8x128xbf16>, vector<128x128xbf16>, vector<8x128xf32> -> vector<8x128xf32>
    %cst_28 = arith.constant 0.000000e+00 : f32
    %38 = vector.broadcast %cst_28 : f32 to vector<8x128xf32>
    %39 = arith.maximumf %37, %38 : vector<8x128xf32>
    %40 = arith.truncf %39 : vector<8x128xf32> to vector<8x128xbf16>
    %c5 = arith.constant 5 : index
    %c0_29 = arith.constant 0 : index
    %c0_30 = arith.constant 0 : index
    %41 = vector.load %arg2[%c5, %c0_29, %c0_30] : memref<10x128x128xbf16, #tpu.memory_space<vmem>>, vector<1x128x128xbf16>
    %42 = vector.shape_cast %41 : vector<1x128x128xbf16> to vector<128x128xbf16>
    %cst_31 = arith.constant dense<0.000000e+00> : vector<8x128xf32>
    %43 = tpu.matmul %40, %42, %cst_31 {dimension_numbers = #tpu.dot_dimension_numbers<[1], [0], [0], [1], [0, 0, 1, 1], [], []>} : vector<8x128xbf16>, vector<128x128xbf16>, vector<8x128xf32> -> vector<8x128xf32>
    %cst_32 = arith.constant 0.000000e+00 : f32
    %44 = vector.broadcast %cst_32 : f32 to vector<8x128xf32>
    %45 = arith.maximumf %43, %44 : vector<8x128xf32>
    %46 = arith.truncf %45 : vector<8x128xf32> to vector<8x128xbf16>
    %c6 = arith.constant 6 : index
    %c0_33 = arith.constant 0 : index
    %c0_34 = arith.constant 0 : index
    %47 = vector.load %arg2[%c6, %c0_33, %c0_34] : memref<10x128x128xbf16, #tpu.memory_space<vmem>>, vector<1x128x128xbf16>
    %48 = vector.shape_cast %47 : vector<1x128x128xbf16> to vector<128x128xbf16>
    %cst_35 = arith.constant dense<0.000000e+00> : vector<8x128xf32>
    %49 = tpu.matmul %46, %48, %cst_35 {dimension_numbers = #tpu.dot_dimension_numbers<[1], [0], [0], [1], [0, 0, 1, 1], [], []>} : vector<8x128xbf16>, vector<128x128xbf16>, vector<8x128xf32> -> vector<8x128xf32>
    %cst_36 = arith.constant 0.000000e+00 : f32
    %50 = vector.broadcast %cst_36 : f32 to vector<8x128xf32>
    %51 = arith.maximumf %49, %50 : vector<8x128xf32>
    %52 = arith.truncf %51 : vector<8x128xf32> to vector<8x128xbf16>
    %c7 = arith.constant 7 : index
    %c0_37 = arith.constant 0 : index
    %c0_38 = arith.constant 0 : index
    %53 = vector.load %arg2[%c7, %c0_37, %c0_38] : memref<10x128x128xbf16, #tpu.memory_space<vmem>>, vector<1x128x128xbf16>
    %54 = vector.shape_cast %53 : vector<1x128x128xbf16> to vector<128x128xbf16>
    %cst_39 = arith.constant dense<0.000000e+00> : vector<8x128xf32>
    %55 = tpu.matmul %52, %54, %cst_39 {dimension_numbers = #tpu.dot_dimension_numbers<[1], [0], [0], [1], [0, 0, 1, 1], [], []>} : vector<8x128xbf16>, vector<128x128xbf16>, vector<8x128xf32> -> vector<8x128xf32>
    %cst_40 = arith.constant 0.000000e+00 : f32
    %56 = vector.broadcast %cst_40 : f32 to vector<8x128xf32>
    %57 = arith.maximumf %55, %56 : vector<8x128xf32>
    %58 = arith.truncf %57 : vector<8x128xf32> to vector<8x128xbf16>
    %c8 = arith.constant 8 : index
    %c0_41 = arith.constant 0 : index
    %c0_42 = arith.constant 0 : index
    %59 = vector.load %arg2[%c8, %c0_41, %c0_42] : memref<10x128x128xbf16, #tpu.memory_space<vmem>>, vector<1x128x128xbf16>
    %60 = vector.shape_cast %59 : vector<1x128x128xbf16> to vector<128x128xbf16>
    %cst_43 = arith.constant dense<0.000000e+00> : vector<8x128xf32>
    %61 = tpu.matmul %58, %60, %cst_43 {dimension_numbers = #tpu.dot_dimension_numbers<[1], [0], [0], [1], [0, 0, 1, 1], [], []>} : vector<8x128xbf16>, vector<128x128xbf16>, vector<8x128xf32> -> vector<8x128xf32>
    %cst_44 = arith.constant 0.000000e+00 : f32
    %62 = vector.broadcast %cst_44 : f32 to vector<8x128xf32>
    %63 = arith.maximumf %61, %62 : vector<8x128xf32>
    %64 = arith.truncf %63 : vector<8x128xf32> to vector<8x128xbf16>
    %c9 = arith.constant 9 : index
    %c0_45 = arith.constant 0 : index
    %c0_46 = arith.constant 0 : index
    %65 = vector.load %arg2[%c9, %c0_45, %c0_46] : memref<10x128x128xbf16, #tpu.memory_space<vmem>>, vector<1x128x128xbf16>
    %66 = vector.shape_cast %65 : vector<1x128x128xbf16> to vector<128x128xbf16>
    %cst_47 = arith.constant dense<0.000000e+00> : vector<8x128xf32>
    %67 = tpu.matmul %64, %66, %cst_47 {dimension_numbers = #tpu.dot_dimension_numbers<[1], [0], [0], [1], [0, 0, 1, 1], [], []>} : vector<8x128xbf16>, vector<128x128xbf16>, vector<8x128xf32> -> vector<8x128xf32>
    %68 = vector.extract_strided_slice %67 {offsets = [0, 0], sizes = [8, 3], strides = [1, 1]} : vector<8x128xf32> to vector<8x3xf32>
    %c0_48 = arith.constant 0 : index
    %c0_49 = arith.constant 0 : index
    %69 = vector.load %arg3[%c0_48, %c0_49] : memref<8x3xf32, #tpu.memory_space<vmem>>, vector<8x3xf32>
    tpu.vector_store %arg3[%c0_48, %c0_49], %68 {strides = array<i32>} : memref<8x3xf32, #tpu.memory_space<vmem>>, vector<8x3xf32>,
    return
  }
  func.func @transform_0(%arg0: i32) -> (i32, i32) {
    %c0_i32 = arith.constant 0 : i32
    %c0_i32_0 = arith.constant 0 : i32
    return %arg0, %c0_i32 : i32, i32
  }
  func.func @transform_1(%arg0: i32) -> (i32, i32, i32) {
    %c0_i32 = arith.constant 0 : i32
    %c0_i32_0 = arith.constant 0 : i32
    %c0_i32_1 = arith.constant 0 : i32
    %c0_i32_2 = arith.constant 0 : i32
    return %c0_i32, %c0_i32_0, %c0_i32_1 : i32, i32, i32
  }
  func.func @transform_2(%arg0: i32) -> (i32, i32) {
    %c0_i32 = arith.constant 0 : i32
    %c0_i32_0 = arith.constant 0 : i32
    return %arg0, %c0_i32 : i32, i32
  }
}

</mosaic_0001>

<llo_original>
// kernel: dqn_forward.1
$region0: #{dqn_forward.1}
  #allocation0 [shape = 'u32[]', space=smem, size = 0x4, offset = 0x4, fixed_abs, tag = 'smem constant byte address 0x4 - core index']
  #allocation1 [shape = 'u32[144,128]{1,0:T(1,128)}', space=vmem, size = 0x12000, scoped, tag = 'internal scratch']
  #allocation2 [shape = 'bf16[8,128]{1,0:T(8,128)(2,1)}', space=vmem, size = 0x800, scoped, tag = 'scratch operand']
  %s0 = inlined_call_operand.vmem [shape: bf16[8,6], index: 0, kind: input, shape index: {}]
  %s1 = inlined_call_operand.hbm [shape: bf16[10,128,128], index: 1, kind: input, shape index: {}]
  %s2 = inlined_call_operand.vmem [shape: f32[8,3], index: 2, kind: output, shape index: {}]
  %s3 = sld [smem:[#allocation0]]
  $region22: #{dqn_forward.1} parent=0
    _
  %s5 = ssub.s32 1, %s3
  %s6 = scalar_select 0, %s5, %s3
  $region1: #{dqn_forward.1} parent=0
    #allocation3 [shape = 'u8[327680]{0}', space=vmem, size = 0x50000, scoped, tag = 'input window, operand 1, single buffered']
    #allocation4 [shape = 's32[1]{0}', space=sflag, size = 0x4, scoped, tag = 'scoped memory for dqn_forward.1']
    %7 = vsyncpa [#allocation4], 0
    // Predicated region
    $region2: #{dqn_forward.1} parent=1 // pred_check
      _
    $region3: #{dqn_forward.1} parent=1 // pred_check_branch
      %9 = sbr.rel (0) target = $region5
    $region4: #{dqn_forward.1} parent=1 // pred_region
      _
    $region5: #{dqn_forward.1} parent=1 // pred_fallthru
      _
    // Predicated region
    $region6: #{dqn_forward.1} parent=1 // pred_check
      _
    $region7: #{dqn_forward.1} parent=1 // pred_check_branch
      %11 = sbr.rel (0) target = $region9
    $region8: #{dqn_forward.1} parent=1 // pred_region
      %s13 = ssub.s32 10240, 10240
      %14 = vsyncadd [#allocation4], %s13
      %s15 = sshll.u32 [#allocation3], 4
      %s16 = int_to_ptr.vmem [resolvable:$true] %s15
      %21 = dma.hbm_to_vmem [thread:$0]  %s1, 10240, %s16, [#allocation4], 64, 64, 4
    $region9: #{dqn_forward.1} parent=1 // pred_fallthru
      _
    // Predicated region
    $region10: #{dqn_forward.1} parent=1 // pred_check
      _
    $region11: #{dqn_forward.1} parent=1 // pred_check_branch
      %23 = sbr.rel (0) target = $region13
    $region12: #{dqn_forward.1} parent=1 // pred_region
      %24 = dma.done [#allocation4], 10240
    $region13: #{dqn_forward.1} parent=1 // pred_fallthru
      _
    %v26 = vlaneseq
    %v27 = vand.u32 %v26, 127
    %vm28 = vcmp.eq.s32.totalorder %v27, 127
    %v29 = vsel %vm28, 1.0, 0.0
    %v30 = vpack.c.bf16 %v29, %v29
    %31 = vst [vmem:[#allocation2] sm:$0xf] %v30
    %v32 = vld [vmem:[%s0] sm:$0xf]
    %vm33 = vcmask 44032
    %34 = vst.msk [vmem:[#allocation2] sm:$0xf] %vm33, %v32
    %v35 = vld [vmem:[#allocation2] sm:$0xf]
    %v36 = vld [vmem:[#allocation3] sm:$0xf]
    %v37 = vld [vmem:[#allocation3 + $0x4] sm:$0xf]
    %v38 = vld [vmem:[#allocation3 + $0x8] sm:$0xf]
    %v39 = vld [vmem:[#allocation3 + $0xc] sm:$0xf]
    %v40 = vld [vmem:[#allocation3 + $0x10] sm:$0xf]
    %v41 = vld [vmem:[#allocation3 + $0x14] sm:$0xf]
    %v42 = vld [vmem:[#allocation3 + $0x18] sm:$0xf]
    %v43 = vld [vmem:[#allocation3 + $0x1c] sm:$0xf]
    %v44 = vld [vmem:[#allocation3 + $0x20] sm:$0xf]
    %v45 = vld [vmem:[#allocation3 + $0x24] sm:$0xf]
    %v46 = vld [vmem:[#allocation3 + $0x28] sm:$0xf]
    %v47 = vld [vmem:[#allocation3 + $0x2c] sm:$0xf]
    %v48 = vld [vmem:[#allocation3 + $0x30] sm:$0xf]
    %v49 = vld [vmem:[#allocation3 + $0x34] sm:$0xf]
    %v50 = vld [vmem:[#allocation3 + $0x38] sm:$0xf]
    %v51 = vld [vmem:[#allocation3 + $0x3c] sm:$0xf]
    %v68 = vunpack.c.l.b16 %v36
    %v69 = vunpack.c.l.b16 %v37
    %v70 = vunpack.c.l.b16 %v38
    %v71 = vunpack.c.l.b16 %v39
    %v72 = vunpack.c.l.b16 %v40
    %v73 = vunpack.c.l.b16 %v41
    %v74 = vunpack.c.l.b16 %v42
    %v75 = vunpack.c.l.b16 %v43
    %v76 = vunpack.c.l.b16 %v44
    %v77 = vunpack.c.l.b16 %v45
    %v78 = vunpack.c.l.b16 %v46
    %v79 = vunpack.c.l.b16 %v47
    %v80 = vunpack.c.l.b16 %v48
    %v81 = vunpack.c.l.b16 %v49
    %v82 = vunpack.c.l.b16 %v50
    %v83 = vunpack.c.l.b16 %v51
    %v84 = vpack.c.b16 %v69, %v68
    %v85 = vpack.c.b16 %v71, %v70
    %v86 = vpack.c.b16 %v73, %v72
    %v87 = vpack.c.b16 %v75, %v74
    %v88 = vpack.c.b16 %v77, %v76
    %v89 = vpack.c.b16 %v79, %v78
    %v90 = vpack.c.b16 %v81, %v80
    %v91 = vpack.c.b16 %v83, %v82
    %100 = vmatprep.subr.bf16.mxu0 0
    %101 = vmatpush1.bf16.msra.mxu0 %v84
    %102 = vmatprep.subr.bf16.mxu0 0
    %103 = vmatpush1.bf16.msra.mxu0 %v85
    %104 = vmatprep.subr.bf16.mxu0 0
    %105 = vmatpush1.bf16.msra.mxu0 %v86
    %106 = vmatprep.subr.bf16.mxu0 0
    %107 = vmatpush1.bf16.msra.mxu0 %v87
    %108 = vmatprep.subr.bf16.mxu0 0
    %109 = vmatpush1.bf16.msra.mxu0 %v88
    %110 = vmatprep.subr.bf16.mxu0 0
    %111 = vmatpush1.bf16.msra.mxu0 %v89
    %112 = vmatprep.subr.bf16.mxu0 0
    %113 = vmatpush1.bf16.msra.mxu0 %v90
    %114 = vmatprep.subr.bf16.mxu0 0
    %115 = vmatpush1.bf16.msra.mxu0 %v91
    %116 = vmatprep.subr.bf16.mxu0 0
    %117 = vmatpush1.bf16.msra.mxu0 0
    %118 = vmatprep.subr.bf16.mxu0 0
    %119 = vmatpush1.bf16.msra.mxu0 0
    %120 = vmatprep.subr.bf16.mxu0 0
    %121 = vmatpush1.bf16.msra.mxu0 0
    %122 = vmatprep.subr.bf16.mxu0 0
    %123 = vmatpush1.bf16.msra.mxu0 0
    %124 = vmatprep.subr.bf16.mxu0 0
    %125 = vmatpush1.bf16.msra.mxu0 0
    %126 = vmatprep.subr.bf16.mxu0 0
    %127 = vmatpush1.bf16.msra.mxu0 0
    %128 = vmatprep.subr.bf16.mxu0 0
    %129 = vmatpush1.bf16.msra.mxu0 0
    %130 = vmatprep.subr.bf16.mxu0 0
    %131 = vmatpush1.bf16.msra.mxu0 0
    %132 = vmatprep.mubr.bf16.mxu0 0
    %133 = vmatmul.mubr.bf16.gmra.mrb[0].mxu0 %v35
    %v134 = vpop.f32.mrb[0].mxu0
    %v135 = vadd.f32 0.0, %v134
    %v136 = vpop.f32.mrb[0].mxu0
    %v137 = vpop.f32.mrb[0].mxu0
    %v138 = vpop.f32.mrb[0].mxu0
    %139 = vdwg.mxu0
    %v140 = vmax.f32 %v135, 0.0
    %v141 = vpack.c.bf16 %v140, %v140
    %s142 = scalar_lea.vmem [#allocation3], 64
    %v143 = vld [vmem:[%s142] sm:$0xf]
    %v144 = vld [vmem:[%s142 + $0x4] sm:$0xf]
    %v145 = vld [vmem:[%s142 + $0x8] sm:$0xf]
    %v146 = vld [vmem:[%s142 + $0xc] sm:$0xf]
    %v147 = vld [vmem:[%s142 + $0x10] sm:$0xf]
    %v148 = vld [vmem:[%s142 + $0x14] sm:$0xf]
    %v149 = vld [vmem:[%s142 + $0x18] sm:$0xf]
    %v150 = vld [vmem:[%s142 + $0x1c] sm:$0xf]
    %v151 = vld [vmem:[%s142 + $0x20] sm:$0xf]
    %v152 = vld [vmem:[%s142 + $0x24] sm:$0xf]
    %v153 = vld [vmem:[%s142 + $0x28] sm:$0xf]
    %v154 = vld [vmem:[%s142 + $0x2c] sm:$0xf]
    %v155 = vld [vmem:[%s142 + $0x30] sm:$0xf]
    %v156 = vld [vmem:[%s142 + $0x34] sm:$0xf]
    %v157 = vld [vmem:[%s142 + $0x38] sm:$0xf]
    %v158 = vld [vmem:[%s142 + $0x3c] sm:$0xf]
    %v175 = vunpack.c.l.b16 %v143
    %v176 = vunpack.c.l.b16 %v144
    %v177 = vunpack.c.l.b16 %v145
    %v178 = vunpack.c.l.b16 %v146
    %v179 = vunpack.c.l.b16 %v147
    %v180 = vunpack.c.l.b16 %v148
    %v181 = vunpack.c.l.b16 %v149
    %v182 = vunpack.c.l.b16 %v150
    %v183 = vunpack.c.l.b16 %v151
    %v184 = vunpack.c.l.b16 %v152
    %v185 = vunpack.c.l.b16 %v153
    %v186 = vunpack.c.l.b16 %v154
    %v187 = vunpack.c.l.b16 %v155
    %v188 = vunpack.c.l.b16 %v156
    %v189 = vunpack.c.l.b16 %v157
    %v190 = vunpack.c.l.b16 %v158
    %v191 = vpack.c.b16 %v176, %v175
    %v192 = vpack.c.b16 %v178, %v177
    %v193 = vpack.c.b16 %v180, %v179
    %v194 = vpack.c.b16 %v182, %v181
    %v195 = vpack.c.b16 %v184, %v183
    %v196 = vpack.c.b16 %v186, %v185
    %v197 = vpack.c.b16 %v188, %v187
    %v198 = vpack.c.b16 %v190, %v189
    %207 = vmatprep.subr.bf16.mxu0 0
    %208 = vmatpush1.bf16.msra.mxu0 %v191
    %209 = vmatprep.subr.bf16.mxu0 0
    %210 = vmatpush1.bf16.msra.mxu0 %v192
    %211 = vmatprep.subr.bf16.mxu0 0
    %212 = vmatpush1.bf16.msra.mxu0 %v193
    %213 = vmatprep.subr.bf16.mxu0 0
    %214 = vmatpush1.bf16.msra.mxu0 %v194
    %215 = vmatprep.subr.bf16.mxu0 0
    %216 = vmatpush1.bf16.msra.mxu0 %v195
    %217 = vmatprep.subr.bf16.mxu0 0
    %218 = vmatpush1.bf16.msra.mxu0 %v196
    %219 = vmatprep.subr.bf16.mxu0 0
    %220 = vmatpush1.bf16.msra.mxu0 %v197
    %221 = vmatprep.subr.bf16.mxu0 0
    %222 = vmatpush1.bf16.msra.mxu0 %v198
    %223 = vmatprep.subr.bf16.mxu0 0
    %224 = vmatpush1.bf16.msra.mxu0 0
    %225 = vmatprep.subr.bf16.mxu0 0
    %226 = vmatpush1.bf16.msra.mxu0 0
    %227 = vmatprep.subr.bf16.mxu0 0
    %228 = vmatpush1.bf16.msra.mxu0 0
    %229 = vmatprep.subr.bf16.mxu0 0
    %230 = vmatpush1.bf16.msra.mxu0 0
    %231 = vmatprep.subr.bf16.mxu0 0
    %232 = vmatpush1.bf16.msra.mxu0 0
    %233 = vmatprep.subr.bf16.mxu0 0
    %234 = vmatpush1.bf16.msra.mxu0 0
    %235 = vmatprep.subr.bf16.mxu0 0
    %236 = vmatpush1.bf16.msra.mxu0 0
    %237 = vmatprep.subr.bf16.mxu0 0
    %238 = vmatpush1.bf16.msra.mxu0 0
    %239 = vmatprep.mubr.bf16.mxu0 0
    %240 = vmatmul.mubr.bf16.gmra.mrb[0].mxu0 %v141
    %v241 = vpop.f32.mrb[0].mxu0
    %v242 = vadd.f32 0.0, %v241
    %v243 = vpop.f32.mrb[0].mxu0
    %v244 = vpop.f32.mrb[0].mxu0
    %v245 = vpop.f32.mrb[0].mxu0
    %246 = vdwg.mxu0
    %v247 = vmax.f32 %v242, 0.0
    %v248 = vpack.c.bf16 %v247, %v247
    %s249 = scalar_lea.vmem [#allocation3], 128
    %v250 = vld [vmem:[%s249] sm:$0xf]
    %v251 = vld [vmem:[%s249 + $0x4] sm:$0xf]
    %v252 = vld [vmem:[%s249 + $0x8] sm:$0xf]
    %v253 = vld [vmem:[%s249 + $0xc] sm:$0xf]
    %v254 = vld [vmem:[%s249 + $0x10] sm:$0xf]
    %v255 = vld [vmem:[%s249 + $0x14] sm:$0xf]
    %v256 = vld [vmem:[%s249 + $0x18] sm:$0xf]
    %v257 = vld [vmem:[%s249 + $0x1c] sm:$0xf]
    %v258 = vld [vmem:[%s249 + $0x20] sm:$0xf]
    %v259 = vld [vmem:[%s249 + $0x24] sm:$0xf]
    %v260 = vld [vmem:[%s249 + $0x28] sm:$0xf]
    %v261 = vld [vmem:[%s249 + $0x2c] sm:$0xf]
    %v262 = vld [vmem:[%s249 + $0x30] sm:$0xf]
    %v263 = vld [vmem:[%s249 + $0x34] sm:$0xf]
    %v264 = vld [vmem:[%s249 + $0x38] sm:$0xf]
    %v265 = vld [vmem:[%s249 + $0x3c] sm:$0xf]
    %v282 = vunpack.c.l.b16 %v250
    %v283 = vunpack.c.l.b16 %v251
    %v284 = vunpack.c.l.b16 %v252
    %v285 = vunpack.c.l.b16 %v253
    %v286 = vunpack.c.l.b16 %v254
    %v287 = vunpack.c.l.b16 %v255
    %v288 = vunpack.c.l.b16 %v256
    %v289 = vunpack.c.l.b16 %v257
    %v290 = vunpack.c.l.b16 %v258
    %v291 = vunpack.c.l.b16 %v259
    %v292 = vunpack.c.l.b16 %v260
    %v293 = vunpack.c.l.b16 %v261
    %v294 = vunpack.c.l.b16 %v262
    %v295 = vunpack.c.l.b16 %v263
    %v296 = vunpack.c.l.b16 %v264
    %v297 = vunpack.c.l.b16 %v265
    %v298 = vpack.c.b16 %v283, %v282
    %v299 = vpack.c.b16 %v285, %v284
    %v300 = vpack.c.b16 %v287, %v286
    %v301 = vpack.c.b16 %v289, %v288
    %v302 = vpack.c.b16 %v291, %v290
    %v303 = vpack.c.b16 %v293, %v292
    %v304 = vpack.c.b16 %v295, %v294
    %v305 = vpack.c.b16 %v297, %v296
    %314 = vmatprep.subr.bf16.mxu0 0
    %315 = vmatpush1.bf16.msra.mxu0 %v298
    %316 = vmatprep.subr.bf16.mxu0 0
    %317 = vmatpush1.bf16.msra.mxu0 %v299
    %318 = vmatprep.subr.bf16.mxu0 0
    %319 = vmatpush1.bf16.msra.mxu0 %v300
    %320 = vmatprep.subr.bf16.mxu0 0
    %321 = vmatpush1.bf16.msra.mxu0 %v301
    %322 = vmatprep.subr.bf16.mxu0 0
    %323 = vmatpush1.bf16.msra.mxu0 %v302
    %324 = vmatprep.subr.bf16.mxu0 0
    %325 = vmatpush1.bf16.msra.mxu0 %v303
    %326 = vmatprep.subr.bf16.mxu0 0
    %327 = vmatpush1.bf16.msra.mxu0 %v304
    %328 = vmatprep.subr.bf16.mxu0 0
    %329 = vmatpush1.bf16.msra.mxu0 %v305
    %330 = vmatprep.subr.bf16.mxu0 0
    %331 = vmatpush1.bf16.msra.mxu0 0
    %332 = vmatprep.subr.bf16.mxu0 0
    %333 = vmatpush1.bf16.msra.mxu0 0
    %334 = vmatprep.subr.bf16.mxu0 0
    %335 = vmatpush1.bf16.msra.mxu0 0
    %336 = vmatprep.subr.bf16.mxu0 0
    %337 = vmatpush1.bf16.msra.mxu0 0
    %338 = vmatprep.subr.bf16.mxu0 0
    %339 = vmatpush1.bf16.msra.mxu0 0
    %340 = vmatprep.subr.bf16.mxu0 0
    %341 = vmatpush1.bf16.msra.mxu0 0
    %342 = vmatprep.subr.bf16.mxu0 0
    %343 = vmatpush1.bf16.msra.mxu0 0
    %344 = vmatprep.subr.bf16.mxu0 0
    %345 = vmatpush1.bf16.msra.mxu0 0
    %346 = vmatprep.mubr.bf16.mxu0 0
    %347 = vmatmul.mubr.bf16.gmra.mrb[0].mxu0 %v248
    %v348 = vpop.f32.mrb[0].mxu0
    %v349 = vadd.f32 0.0, %v348
    %v350 = vpop.f32.mrb[0].mxu0
    %v351 = vpop.f32.mrb[0].mxu0
    %v352 = vpop.f32.mrb[0].mxu0
    %353 = vdwg.mxu0
    %v354 = vmax.f32 %v349, 0.0
    %v355 = vpack.c.bf16 %v354, %v354
    %s356 = scalar_lea.vmem [#allocation3], 192
    %v357 = vld [vmem:[%s356] sm:$0xf]
    %v358 = vld [vmem:[%s356 + $0x4] sm:$0xf]
    %v359 = vld [vmem:[%s356 + $0x8] sm:$0xf]
    %v360 = vld [vmem:[%s356 + $0xc] sm:$0xf]
    %v361 = vld [vmem:[%s356 + $0x10] sm:$0xf]
    %v362 = vld [vmem:[%s356 + $0x14] sm:$0xf]
    %v363 = vld [vmem:[%s356 + $0x18] sm:$0xf]
    %v364 = vld [vmem:[%s356 + $0x1c] sm:$0xf]
    %v365 = vld [vmem:[%s356 + $0x20] sm:$0xf]
    %v366 = vld [vmem:[%s356 + $0x24] sm:$0xf]
    %v367 = vld [vmem:[%s356 + $0x28] sm:$0xf]
    %v368 = vld [vmem:[%s356 + $0x2c] sm:$0xf]
    %v369 = vld [vmem:[%s356 + $0x30] sm:$0xf]
    %v370 = vld [vmem:[%s356 + $0x34] sm:$0xf]
    %v371 = vld [vmem:[%s356 + $0x38] sm:$0xf]
    %v372 = vld [vmem:[%s356 + $0x3c] sm:$0xf]
    %v389 = vunpack.c.l.b16 %v357
    %v390 = vunpack.c.l.b16 %v358
    %v391 = vunpack.c.l.b16 %v359
    %v392 = vunpack.c.l.b16 %v360
    %v393 = vunpack.c.l.b16 %v361
    %v394 = vunpack.c.l.b16 %v362
    %v395 = vunpack.c.l.b16 %v363
    %v396 = vunpack.c.l.b16 %v364
    %v397 = vunpack.c.l.b16 %v365
    %v398 = vunpack.c.l.b16 %v366
    %v399 = vunpack.c.l.b16 %v367
    %v400 = vunpack.c.l.b16 %v368
    %v401 = vunpack.c.l.b16 %v369
    %v402 = vunpack.c.l.b16 %v370
    %v403 = vunpack.c.l.b16 %v371
    %v404 = vunpack.c.l.b16 %v372
    %v405 = vpack.c.b16 %v390, %v389
    %v406 = vpack.c.b16 %v392, %v391
    %v407 = vpack.c.b16 %v394, %v393
    %v408 = vpack.c.b16 %v396, %v395
    %v409 = vpack.c.b16 %v398, %v397
    %v410 = vpack.c.b16 %v400, %v399
    %v411 = vpack.c.b16 %v402, %v401
    %v412 = vpack.c.b16 %v404, %v403
    %421 = vmatprep.subr.bf16.mxu0 0
    %422 = vmatpush1.bf16.msra.mxu0 %v405
    %423 = vmatprep.subr.bf16.mxu0 0
    %424 = vmatpush1.bf16.msra.mxu0 %v406
    %425 = vmatprep.subr.bf16.mxu0 0
    %426 = vmatpush1.bf16.msra.mxu0 %v407
    %427 = vmatprep.subr.bf16.mxu0 0
    %428 = vmatpush1.bf16.msra.mxu0 %v408
    %429 = vmatprep.subr.bf16.mxu0 0
    %430 = vmatpush1.bf16.msra.mxu0 %v409
    %431 = vmatprep.subr.bf16.mxu0 0
    %432 = vmatpush1.bf16.msra.mxu0 %v410
    %433 = vmatprep.subr.bf16.mxu0 0
    %434 = vmatpush1.bf16.msra.mxu0 %v411
    %435 = vmatprep.subr.bf16.mxu0 0
    %436 = vmatpush1.bf16.msra.mxu0 %v412
    %437 = vmatprep.subr.bf16.mxu0 0
    %438 = vmatpush1.bf16.msra.mxu0 0
    %439 = vmatprep.subr.bf16.mxu0 0
    %440 = vmatpush1.bf16.msra.mxu0 0
    %441 = vmatprep.subr.bf16.mxu0 0
    %442 = vmatpush1.bf16.msra.mxu0 0
    %443 = vmatprep.subr.bf16.mxu0 0
    %444 = vmatpush1.bf16.msra.mxu0 0
    %445 = vmatprep.subr.bf16.mxu0 0
    %446 = vmatpush1.bf16.msra.mxu0 0
    %447 = vmatprep.subr.bf16.mxu0 0
    %448 = vmatpush1.bf16.msra.mxu0 0
    %449 = vmatprep.subr.bf16.mxu0 0
    %450 = vmatpush1.bf16.msra.mxu0 0
    %451 = vmatprep.subr.bf16.mxu0 0
    %452 = vmatpush1.bf16.msra.mxu0 0
    %453 = vmatprep.mubr.bf16.mxu0 0
    %454 = vmatmul.mubr.bf16.gmra.mrb[0].mxu0 %v355
    %v455 = vpop.f32.mrb[0].mxu0
    %v456 = vadd.f32 0.0, %v455
    %v457 = vpop.f32.mrb[0].mxu0
    %v458 = vpop.f32.mrb[0].mxu0
    %v459 = vpop.f32.mrb[0].mxu0
    %460 = vdwg.mxu0
    %v461 = vmax.f32 %v456, 0.0
    %v462 = vpack.c.bf16 %v461, %v461
    %s463 = scalar_lea.vmem [#allocation3], 256
    %v464 = vld [vmem:[%s463] sm:$0xf]
    %v465 = vld [vmem:[%s463 + $0x4] sm:$0xf]
    %v466 = vld [vmem:[%s463 + $0x8] sm:$0xf]
    %v467 = vld [vmem:[%s463 + $0xc] sm:$0xf]
    %v468 = vld [vmem:[%s463 + $0x10] sm:$0xf]
    %v469 = vld [vmem:[%s463 + $0x14] sm:$0xf]
    %v470 = vld [vmem:[%s463 + $0x18] sm:$0xf]
    %v471 = vld [vmem:[%s463 + $0x1c] sm:$0xf]
    %v472 = vld [vmem:[%s463 + $0x20] sm:$0xf]
    %v473 = vld [vmem:[%s463 + $0x24] sm:$0xf]
    %v474 = vld [vmem:[%s463 + $0x28] sm:$0xf]
    %v475 = vld [vmem:[%s463 + $0x2c] sm:$0xf]
    %v476 = vld [vmem:[%s463 + $0x30] sm:$0xf]
    %v477 = vld [vmem:[%s463 + $0x34] sm:$0xf]
    %v478 = vld [vmem:[%s463 + $0x38] sm:$0xf]
    %v479 = vld [vmem:[%s463 + $0x3c] sm:$0xf]
    %v496 = vunpack.c.l.b16 %v464
    %v497 = vunpack.c.l.b16 %v465
    %v498 = vunpack.c.l.b16 %v466
    %v499 = vunpack.c.l.b16 %v467
    %v500 = vunpack.c.l.b16 %v468
    %v501 = vunpack.c.l.b16 %v469
    %v502 = vunpack.c.l.b16 %v470
    %v503 = vunpack.c.l.b16 %v471
    %v504 = vunpack.c.l.b16 %v472
    %v505 = vunpack.c.l.b16 %v473
    %v506 = vunpack.c.l.b16 %v474
    %v507 = vunpack.c.l.b16 %v475
    %v508 = vunpack.c.l.b16 %v476
    %v509 = vunpack.c.l.b16 %v477
    %v510 = vunpack.c.l.b16 %v478
    %v511 = vunpack.c.l.b16 %v479
    %v512 = vpack.c.b16 %v497, %v496
    %v513 = vpack.c.b16 %v499, %v498
    %v514 = vpack.c.b16 %v501, %v500
    %v515 = vpack.c.b16 %v503, %v502
    %v516 = vpack.c.b16 %v505, %v504
    %v517 = vpack.c.b16 %v507, %v506
    %v518 = vpack.c.b16 %v509, %v508
    %v519 = vpack.c.b16 %v511, %v510
    %528 = vmatprep.subr.bf16.mxu0 0
    %529 = vmatpush1.bf16.msra.mxu0 %v512
    %530 = vmatprep.subr.bf16.mxu0 0
    %531 = vmatpush1.bf16.msra.mxu0 %v513
    %532 = vmatprep.subr.bf16.mxu0 0
    %533 = vmatpush1.bf16.msra.mxu0 %v514
    %534 = vmatprep.subr.bf16.mxu0 0
    %535 = vmatpush1.bf16.msra.mxu0 %v515
    %536 = vmatprep.subr.bf16.mxu0 0
    %537 = vmatpush1.bf16.msra.mxu0 %v516
    %538 = vmatprep.subr.bf16.mxu0 0
    %539 = vmatpush1.bf16.msra.mxu0 %v517
    %540 = vmatprep.subr.bf16.mxu0 0
    %541 = vmatpush1.bf16.msra.mxu0 %v518
    %542 = vmatprep.subr.bf16.mxu0 0
    %543 = vmatpush1.bf16.msra.mxu0 %v519
    %544 = vmatprep.subr.bf16.mxu0 0
    %545 = vmatpush1.bf16.msra.mxu0 0
    %546 = vmatprep.subr.bf16.mxu0 0
    %547 = vmatpush1.bf16.msra.mxu0 0
    %548 = vmatprep.subr.bf16.mxu0 0
    %549 = vmatpush1.bf16.msra.mxu0 0
    %550 = vmatprep.subr.bf16.mxu0 0
    %551 = vmatpush1.bf16.msra.mxu0 0
    %552 = vmatprep.subr.bf16.mxu0 0
    %553 = vmatpush1.bf16.msra.mxu0 0
    %554 = vmatprep.subr.bf16.mxu0 0
    %555 = vmatpush1.bf16.msra.mxu0 0
    %556 = vmatprep.subr.bf16.mxu0 0
    %557 = vmatpush1.bf16.msra.mxu0 0
    %558 = vmatprep.subr.bf16.mxu0 0
    %559 = vmatpush1.bf16.msra.mxu0 0
    %560 = vmatprep.mubr.bf16.mxu0 0
    %561 = vmatmul.mubr.bf16.gmra.mrb[0].mxu0 %v462
    %v562 = vpop.f32.mrb[0].mxu0
    %v563 = vadd.f32 0.0, %v562
    %v564 = vpop.f32.mrb[0].mxu0
    %v565 = vpop.f32.mrb[0].mxu0
    %v566 = vpop.f32.mrb[0].mxu0
    %567 = vdwg.mxu0
    %v568 = vmax.f32 %v563, 0.0
    %v569 = vpack.c.bf16 %v568, %v568
    %s570 = scalar_lea.vmem [#allocation3], 320
    %v571 = vld [vmem:[%s570] sm:$0xf]
    %v572 = vld [vmem:[%s570 + $0x4] sm:$0xf]
    %v573 = vld [vmem:[%s570 + $0x8] sm:$0xf]
    %v574 = vld [vmem:[%s570 + $0xc] sm:$0xf]
    %v575 = vld [vmem:[%s570 + $0x10] sm:$0xf]
    %v576 = vld [vmem:[%s570 + $0x14] sm:$0xf]
    %v577 = vld [vmem:[%s570 + $0x18] sm:$0xf]
    %v578 = vld [vmem:[%s570 + $0x1c] sm:$0xf]
    %v579 = vld [vmem:[%s570 + $0x20] sm:$0xf]
    %v580 = vld [vmem:[%s570 + $0x24] sm:$0xf]
    %v581 = vld [vmem:[%s570 + $0x28] sm:$0xf]
    %v582 = vld [vmem:[%s570 + $0x2c] sm:$0xf]
    %v583 = vld [vmem:[%s570 + $0x30] sm:$0xf]
    %v584 = vld [vmem:[%s570 + $0x34] sm:$0xf]
    %v585 = vld [vmem:[%s570 + $0x38] sm:$0xf]
    %v586 = vld [vmem:[%s570 + $0x3c] sm:$0xf]
    %v603 = vunpack.c.l.b16 %v571
    %v604 = vunpack.c.l.b16 %v572
    %v605 = vunpack.c.l.b16 %v573
    %v606 = vunpack.c.l.b16 %v574
    %v607 = vunpack.c.l.b16 %v575
    %v608 = vunpack.c.l.b16 %v576
    %v609 = vunpack.c.l.b16 %v577
    %v610 = vunpack.c.l.b16 %v578
    %v611 = vunpack.c.l.b16 %v579
    %v612 = vunpack.c.l.b16 %v580
    %v613 = vunpack.c.l.b16 %v581
    %v614 = vunpack.c.l.b16 %v582
    %v615 = vunpack.c.l.b16 %v583
    %v616 = vunpack.c.l.b16 %v584
    %v617 = vunpack.c.l.b16 %v585
    %v618 = vunpack.c.l.b16 %v586
    %v619 = vpack.c.b16 %v604, %v603
    %v620 = vpack.c.b16 %v606, %v605
    %v621 = vpack.c.b16 %v608, %v607
    %v622 = vpack.c.b16 %v610, %v609
    %v623 = vpack.c.b16 %v612, %v611
    %v624 = vpack.c.b16 %v614, %v613
    %v625 = vpack.c.b16 %v616, %v615
    %v626 = vpack.c.b16 %v618, %v617
    %635 = vmatprep.subr.bf16.mxu0 0
    %636 = vmatpush1.bf16.msra.mxu0 %v619
    %637 = vmatprep.subr.bf16.mxu0 0
    %638 = vmatpush1.bf16.msra.mxu0 %v620
    %639 = vmatprep.subr.bf16.mxu0 0
    %640 = vmatpush1.bf16.msra.mxu0 %v621
    %641 = vmatprep.subr.bf16.mxu0 0
    %642 = vmatpush1.bf16.msra.mxu0 %v622
    %643 = vmatprep.subr.bf16.mxu0 0
    %644 = vmatpush1.bf16.msra.mxu0 %v623
    %645 = vmatprep.subr.bf16.mxu0 0
    %646 = vmatpush1.bf16.msra.mxu0 %v624
    %647 = vmatprep.subr.bf16.mxu0 0
    %648 = vmatpush1.bf16.msra.mxu0 %v625
    %649 = vmatprep.subr.bf16.mxu0 0
    %650 = vmatpush1.bf16.msra.mxu0 %v626
    %651 = vmatprep.subr.bf16.mxu0 0
    %652 = vmatpush1.bf16.msra.mxu0 0
    %653 = vmatprep.subr.bf16.mxu0 0
    %654 = vmatpush1.bf16.msra.mxu0 0
    %655 = vmatprep.subr.bf16.mxu0 0
    %656 = vmatpush1.bf16.msra.mxu0 0
    %657 = vmatprep.subr.bf16.mxu0 0
    %658 = vmatpush1.bf16.msra.mxu0 0
    %659 = vmatprep.subr.bf16.mxu0 0
    %660 = vmatpush1.bf16.msra.mxu0 0
    %661 = vmatprep.subr.bf16.mxu0 0
    %662 = vmatpush1.bf16.msra.mxu0 0
    %663 = vmatprep.subr.bf16.mxu0 0
    %664 = vmatpush1.bf16.msra.mxu0 0
    %665 = vmatprep.subr.bf16.mxu0 0
    %666 = vmatpush1.bf16.msra.mxu0 0
    %667 = vmatprep.mubr.bf16.mxu0 0
    %668 = vmatmul.mubr.bf16.gmra.mrb[0].mxu0 %v569
    %v669 = vpop.f32.mrb[0].mxu0
    %v670 = vadd.f32 0.0, %v669
    %v671 = vpop.f32.mrb[0].mxu0
    %v672 = vpop.f32.mrb[0].mxu0
    %v673 = vpop.f32.mrb[0].mxu0
    %674 = vdwg.mxu0
    %v675 = vmax.f32 %v670, 0.0
    %v676 = vpack.c.bf16 %v675, %v675
    %s677 = scalar_lea.vmem [#allocation3], 384
    %v678 = vld [vmem:[%s677] sm:$0xf]
    %v679 = vld [vmem:[%s677 + $0x4] sm:$0xf]
    %v680 = vld [vmem:[%s677 + $0x8] sm:$0xf]
    %v681 = vld [vmem:[%s677 + $0xc] sm:$0xf]
    %v682 = vld [vmem:[%s677 + $0x10] sm:$0xf]
    %v683 = vld [vmem:[%s677 + $0x14] sm:$0xf]
    %v684 = vld [vmem:[%s677 + $0x18] sm:$0xf]
    %v685 = vld [vmem:[%s677 + $0x1c] sm:$0xf]
    %v686 = vld [vmem:[%s677 + $0x20] sm:$0xf]
    %v687 = vld [vmem:[%s677 + $0x24] sm:$0xf]
    %v688 = vld [vmem:[%s677 + $0x28] sm:$0xf]
    %v689 = vld [vmem:[%s677 + $0x2c] sm:$0xf]
    %v690 = vld [vmem:[%s677 + $0x30] sm:$0xf]
    %v691 = vld [vmem:[%s677 + $0x34] sm:$0xf]
    %v692 = vld [vmem:[%s677 + $0x38] sm:$0xf]
    %v693 = vld [vmem:[%s677 + $0x3c] sm:$0xf]
    %v710 = vunpack.c.l.b16 %v678
    %v711 = vunpack.c.l.b16 %v679
    %v712 = vunpack.c.l.b16 %v680
    %v713 = vunpack.c.l.b16 %v681
    %v714 = vunpack.c.l.b16 %v682
    %v715 = vunpack.c.l.b16 %v683
    %v716 = vunpack.c.l.b16 %v684
    %v717 = vunpack.c.l.b16 %v685
    %v718 = vunpack.c.l.b16 %v686
    %v719 = vunpack.c.l.b16 %v687
    %v720 = vunpack.c.l.b16 %v688
    %v721 = vunpack.c.l.b16 %v689
    %v722 = vunpack.c.l.b16 %v690
    %v723 = vunpack.c.l.b16 %v691
    %v724 = vunpack.c.l.b16 %v692
    %v725 = vunpack.c.l.b16 %v693
    %v726 = vpack.c.b16 %v711, %v710
    %v727 = vpack.c.b16 %v713, %v712
    %v728 = vpack.c.b16 %v715, %v714
    %v729 = vpack.c.b16 %v717, %v716
    %v730 = vpack.c.b16 %v719, %v718
    %v731 = vpack.c.b16 %v721, %v720
    %v732 = vpack.c.b16 %v723, %v722
    %v733 = vpack.c.b16 %v725, %v724
    %742 = vmatprep.subr.bf16.mxu0 0
    %743 = vmatpush1.bf16.msra.mxu0 %v726
    %744 = vmatprep.subr.bf16.mxu0 0
    %745 = vmatpush1.bf16.msra.mxu0 %v727
    %746 = vmatprep.subr.bf16.mxu0 0
    %747 = vmatpush1.bf16.msra.mxu0 %v728
    %748 = vmatprep.subr.bf16.mxu0 0
    %749 = vmatpush1.bf16.msra.mxu0 %v729
    %750 = vmatprep.subr.bf16.mxu0 0
    %751 = vmatpush1.bf16.msra.mxu0 %v730
    %752 = vmatprep.subr.bf16.mxu0 0
    %753 = vmatpush1.bf16.msra.mxu0 %v731
    %754 = vmatprep.subr.bf16.mxu0 0
    %755 = vmatpush1.bf16.msra.mxu0 %v732
    %756 = vmatprep.subr.bf16.mxu0 0
    %757 = vmatpush1.bf16.msra.mxu0 %v733
    %758 = vmatprep.subr.bf16.mxu0 0
    %759 = vmatpush1.bf16.msra.mxu0 0
    %760 = vmatprep.subr.bf16.mxu0 0
    %761 = vmatpush1.bf16.msra.mxu0 0
    %762 = vmatprep.subr.bf16.mxu0 0
    %763 = vmatpush1.bf16.msra.mxu0 0
    %764 = vmatprep.subr.bf16.mxu0 0
    %765 = vmatpush1.bf16.msra.mxu0 0
    %766 = vmatprep.subr.bf16.mxu0 0
    %767 = vmatpush1.bf16.msra.mxu0 0
    %768 = vmatprep.subr.bf16.mxu0 0
    %769 = vmatpush1.bf16.msra.mxu0 0
    %770 = vmatprep.subr.bf16.mxu0 0
    %771 = vmatpush1.bf16.msra.mxu0 0
    %772 = vmatprep.subr.bf16.mxu0 0
    %773 = vmatpush1.bf16.msra.mxu0 0
    %774 = vmatprep.mubr.bf16.mxu0 0
    %775 = vmatmul.mubr.bf16.gmra.mrb[0].mxu0 %v676
    %v776 = vpop.f32.mrb[0].mxu0
    %v777 = vadd.f32 0.0, %v776
    %v778 = vpop.f32.mrb[0].mxu0
    %v779 = vpop.f32.mrb[0].mxu0
    %v780 = vpop.f32.mrb[0].mxu0
    %781 = vdwg.mxu0
    %v782 = vmax.f32 %v777, 0.0
    %v783 = vpack.c.bf16 %v782, %v782
    %s784 = scalar_lea.vmem [#allocation3], 448
    %v785 = vld [vmem:[%s784] sm:$0xf]
    %v786 = vld [vmem:[%s784 + $0x4] sm:$0xf]
    %v787 = vld [vmem:[%s784 + $0x8] sm:$0xf]
    %v788 = vld [vmem:[%s784 + $0xc] sm:$0xf]
    %v789 = vld [vmem:[%s784 + $0x10] sm:$0xf]
    %v790 = vld [vmem:[%s784 + $0x14] sm:$0xf]
    %v791 = vld [vmem:[%s784 + $0x18] sm:$0xf]
    %v792 = vld [vmem:[%s784 + $0x1c] sm:$0xf]
    %v793 = vld [vmem:[%s784 + $0x20] sm:$0xf]
    %v794 = vld [vmem:[%s784 + $0x24] sm:$0xf]
    %v795 = vld [vmem:[%s784 + $0x28] sm:$0xf]
    %v796 = vld [vmem:[%s784 + $0x2c] sm:$0xf]
    %v797 = vld [vmem:[%s784 + $0x30] sm:$0xf]
    %v798 = vld [vmem:[%s784 + $0x34] sm:$0xf]
    %v799 = vld [vmem:[%s784 + $0x38] sm:$0xf]
    %v800 = vld [vmem:[%s784 + $0x3c] sm:$0xf]
    %v817 = vunpack.c.l.b16 %v785
    %v818 = vunpack.c.l.b16 %v786
    %v819 = vunpack.c.l.b16 %v787
    %v820 = vunpack.c.l.b16 %v788
    %v821 = vunpack.c.l.b16 %v789
    %v822 = vunpack.c.l.b16 %v790
    %v823 = vunpack.c.l.b16 %v791
    %v824 = vunpack.c.l.b16 %v792
    %v825 = vunpack.c.l.b16 %v793
    %v826 = vunpack.c.l.b16 %v794
    %v827 = vunpack.c.l.b16 %v795
    %v828 = vunpack.c.l.b16 %v796
    %v829 = vunpack.c.l.b16 %v797
    %v830 = vunpack.c.l.b16 %v798
    %v831 = vunpack.c.l.b16 %v799
    %v832 = vunpack.c.l.b16 %v800
    %v833 = vpack.c.b16 %v818, %v817
    %v834 = vpack.c.b16 %v820, %v819
    %v835 = vpack.c.b16 %v822, %v821
    %v836 = vpack.c.b16 %v824, %v823
    %v837 = vpack.c.b16 %v826, %v825
    %v838 = vpack.c.b16 %v828, %v827
    %v839 = vpack.c.b16 %v830, %v829
    %v840 = vpack.c.b16 %v832, %v831
    %849 = vmatprep.subr.bf16.mxu0 0
    %850 = vmatpush1.bf16.msra.mxu0 %v833
    %851 = vmatprep.subr.bf16.mxu0 0
    %852 = vmatpush1.bf16.msra.mxu0 %v834
    %853 = vmatprep.subr.bf16.mxu0 0
    %854 = vmatpush1.bf16.msra.mxu0 %v835
    %855 = vmatprep.subr.bf16.mxu0 0
    %856 = vmatpush1.bf16.msra.mxu0 %v836
    %857 = vmatprep.subr.bf16.mxu0 0
    %858 = vmatpush1.bf16.msra.mxu0 %v837
    %859 = vmatprep.subr.bf16.mxu0 0
    %860 = vmatpush1.bf16.msra.mxu0 %v838
    %861 = vmatprep.subr.bf16.mxu0 0
    %862 = vmatpush1.bf16.msra.mxu0 %v839
    %863 = vmatprep.subr.bf16.mxu0 0
    %864 = vmatpush1.bf16.msra.mxu0 %v840
    %865 = vmatprep.subr.bf16.mxu0 0
    %866 = vmatpush1.bf16.msra.mxu0 0
    %867 = vmatprep.subr.bf16.mxu0 0
    %868 = vmatpush1.bf16.msra.mxu0 0
    %869 = vmatprep.subr.bf16.mxu0 0
    %870 = vmatpush1.bf16.msra.mxu0 0
    %871 = vmatprep.subr.bf16.mxu0 0
    %872 = vmatpush1.bf16.msra.mxu0 0
    %873 = vmatprep.subr.bf16.mxu0 0
    %874 = vmatpush1.bf16.msra.mxu0 0
    %875 = vmatprep.subr.bf16.mxu0 0
    %876 = vmatpush1.bf16.msra.mxu0 0
    %877 = vmatprep.subr.bf16.mxu0 0
    %878 = vmatpush1.bf16.msra.mxu0 0
    %879 = vmatprep.subr.bf16.mxu0 0
    %880 = vmatpush1.bf16.msra.mxu0 0
    %881 = vmatprep.mubr.bf16.mxu0 0
    %882 = vmatmul.mubr.bf16.gmra.mrb[0].mxu0 %v783
    %v883 = vpop.f32.mrb[0].mxu0
    %v884 = vadd.f32 0.0, %v883
    %v885 = vpop.f32.mrb[0].mxu0
    %v886 = vpop.f32.mrb[0].mxu0
    %v887 = vpop.f32.mrb[0].mxu0
    %888 = vdwg.mxu0
    %v889 = vmax.f32 %v884, 0.0
    %v890 = vpack.c.bf16 %v889, %v889
    %s891 = scalar_lea.vmem [#allocation3], 512
    %v892 = vld [vmem:[%s891] sm:$0xf]
    %v893 = vld [vmem:[%s891 + $0x4] sm:$0xf]
    %v894 = vld [vmem:[%s891 + $0x8] sm:$0xf]
    %v895 = vld [vmem:[%s891 + $0xc] sm:$0xf]
    %v896 = vld [vmem:[%s891 + $0x10] sm:$0xf]
    %v897 = vld [vmem:[%s891 + $0x14] sm:$0xf]
    %v898 = vld [vmem:[%s891 + $0x18] sm:$0xf]
    %v899 = vld [vmem:[%s891 + $0x1c] sm:$0xf]
    %v900 = vld [vmem:[%s891 + $0x20] sm:$0xf]
    %v901 = vld [vmem:[%s891 + $0x24] sm:$0xf]
    %v902 = vld [vmem:[%s891 + $0x28] sm:$0xf]
    %v903 = vld [vmem:[%s891 + $0x2c] sm:$0xf]
    %v904 = vld [vmem:[%s891 + $0x30] sm:$0xf]
    %v905 = vld [vmem:[%s891 + $0x34] sm:$0xf]
    %v906 = vld [vmem:[%s891 + $0x38] sm:$0xf]
    %v907 = vld [vmem:[%s891 + $0x3c] sm:$0xf]
    %v924 = vunpack.c.l.b16 %v892
    %v925 = vunpack.c.l.b16 %v893
    %v926 = vunpack.c.l.b16 %v894
    %v927 = vunpack.c.l.b16 %v895
    %v928 = vunpack.c.l.b16 %v896
    %v929 = vunpack.c.l.b16 %v897
    %v930 = vunpack.c.l.b16 %v898
    %v931 = vunpack.c.l.b16 %v899
    %v932 = vunpack.c.l.b16 %v900
    %v933 = vunpack.c.l.b16 %v901
    %v934 = vunpack.c.l.b16 %v902
    %v935 = vunpack.c.l.b16 %v903
    %v936 = vunpack.c.l.b16 %v904
    %v937 = vunpack.c.l.b16 %v905
    %v938 = vunpack.c.l.b16 %v906
    %v939 = vunpack.c.l.b16 %v907
    %v940 = vpack.c.b16 %v925, %v924
    %v941 = vpack.c.b16 %v927, %v926
    %v942 = vpack.c.b16 %v929, %v928
    %v943 = vpack.c.b16 %v931, %v930
    %v944 = vpack.c.b16 %v933, %v932
    %v945 = vpack.c.b16 %v935, %v934
    %v946 = vpack.c.b16 %v937, %v936
    %v947 = vpack.c.b16 %v939, %v938
    %956 = vmatprep.subr.bf16.mxu0 0
    %957 = vmatpush1.bf16.msra.mxu0 %v940
    %958 = vmatprep.subr.bf16.mxu0 0
    %959 = vmatpush1.bf16.msra.mxu0 %v941
    %960 = vmatprep.subr.bf16.mxu0 0
    %961 = vmatpush1.bf16.msra.mxu0 %v942
    %962 = vmatprep.subr.bf16.mxu0 0
    %963 = vmatpush1.bf16.msra.mxu0 %v943
    %964 = vmatprep.subr.bf16.mxu0 0
    %965 = vmatpush1.bf16.msra.mxu0 %v944
    %966 = vmatprep.subr.bf16.mxu0 0
    %967 = vmatpush1.bf16.msra.mxu0 %v945
    %968 = vmatprep.subr.bf16.mxu0 0
    %969 = vmatpush1.bf16.msra.mxu0 %v946
    %970 = vmatprep.subr.bf16.mxu0 0
    %971 = vmatpush1.bf16.msra.mxu0 %v947
    %972 = vmatprep.subr.bf16.mxu0 0
    %973 = vmatpush1.bf16.msra.mxu0 0
    %974 = vmatprep.subr.bf16.mxu0 0
    %975 = vmatpush1.bf16.msra.mxu0 0
    %976 = vmatprep.subr.bf16.mxu0 0
    %977 = vmatpush1.bf16.msra.mxu0 0
    %978 = vmatprep.subr.bf16.mxu0 0
    %979 = vmatpush1.bf16.msra.mxu0 0
    %980 = vmatprep.subr.bf16.mxu0 0
    %981 = vmatpush1.bf16.msra.mxu0 0
    %982 = vmatprep.subr.bf16.mxu0 0
    %983 = vmatpush1.bf16.msra.mxu0 0
    %984 = vmatprep.subr.bf16.mxu0 0
    %985 = vmatpush1.bf16.msra.mxu0 0
    %986 = vmatprep.subr.bf16.mxu0 0
    %987 = vmatpush1.bf16.msra.mxu0 0
    %988 = vmatprep.mubr.bf16.mxu0 0
    %989 = vmatmul.mubr.bf16.gmra.mrb[0].mxu0 %v890
    %v990 = vpop.f32.mrb[0].mxu0
    %v991 = vadd.f32 0.0, %v990
    %v992 = vpop.f32.mrb[0].mxu0
    %v993 = vpop.f32.mrb[0].mxu0
    %v994 = vpop.f32.mrb[0].mxu0
    %995 = vdwg.mxu0
    %v996 = vmax.f32 %v991, 0.0
    %v997 = vpack.c.bf16 %v996, %v996
    %s998 = scalar_lea.vmem [#allocation3], 576
    %v999 = vld [vmem:[%s998] sm:$0xf]
    %v1000 = vld [vmem:[%s998 + $0x4] sm:$0xf]
    %v1001 = vld [vmem:[%s998 + $0x8] sm:$0xf]
    %v1002 = vld [vmem:[%s998 + $0xc] sm:$0xf]
    %v1003 = vld [vmem:[%s998 + $0x10] sm:$0xf]
    %v1004 = vld [vmem:[%s998 + $0x14] sm:$0xf]
    %v1005 = vld [vmem:[%s998 + $0x18] sm:$0xf]
    %v1006 = vld [vmem:[%s998 + $0x1c] sm:$0xf]
    %v1007 = vld [vmem:[%s998 + $0x20] sm:$0xf]
    %v1008 = vld [vmem:[%s998 + $0x24] sm:$0xf]
    %v1009 = vld [vmem:[%s998 + $0x28] sm:$0xf]
    %v1010 = vld [vmem:[%s998 + $0x2c] sm:$0xf]
    %v1011 = vld [vmem:[%s998 + $0x30] sm:$0xf]
    %v1012 = vld [vmem:[%s998 + $0x34] sm:$0xf]
    %v1013 = vld [vmem:[%s998 + $0x38] sm:$0xf]
    %v1014 = vld [vmem:[%s998 + $0x3c] sm:$0xf]
    %v1031 = vunpack.c.l.b16 %v999
    %v1032 = vunpack.c.l.b16 %v1000
    %v1033 = vunpack.c.l.b16 %v1001
    %v1034 = vunpack.c.l.b16 %v1002
    %v1035 = vunpack.c.l.b16 %v1003
    %v1036 = vunpack.c.l.b16 %v1004
    %v1037 = vunpack.c.l.b16 %v1005
    %v1038 = vunpack.c.l.b16 %v1006
    %v1039 = vunpack.c.l.b16 %v1007
    %v1040 = vunpack.c.l.b16 %v1008
    %v1041 = vunpack.c.l.b16 %v1009
    %v1042 = vunpack.c.l.b16 %v1010
    %v1043 = vunpack.c.l.b16 %v1011
    %v1044 = vunpack.c.l.b16 %v1012
    %v1045 = vunpack.c.l.b16 %v1013
    %v1046 = vunpack.c.l.b16 %v1014
    %v1047 = vpack.c.b16 %v1032, %v1031
    %v1048 = vpack.c.b16 %v1034, %v1033
    %v1049 = vpack.c.b16 %v1036, %v1035
    %v1050 = vpack.c.b16 %v1038, %v1037
    %v1051 = vpack.c.b16 %v1040, %v1039
    %v1052 = vpack.c.b16 %v1042, %v1041
    %v1053 = vpack.c.b16 %v1044, %v1043
    %v1054 = vpack.c.b16 %v1046, %v1045
    %1063 = vmatprep.subr.bf16.mxu0 0
    %1064 = vmatpush1.bf16.msra.mxu0 %v1047
    %1065 = vmatprep.subr.bf16.mxu0 0
    %1066 = vmatpush1.bf16.msra.mxu0 %v1048
    %1067 = vmatprep.subr.bf16.mxu0 0
    %1068 = vmatpush1.bf16.msra.mxu0 %v1049
    %1069 = vmatprep.subr.bf16.mxu0 0
    %1070 = vmatpush1.bf16.msra.mxu0 %v1050
    %1071 = vmatprep.subr.bf16.mxu0 0
    %1072 = vmatpush1.bf16.msra.mxu0 %v1051
    %1073 = vmatprep.subr.bf16.mxu0 0
    %1074 = vmatpush1.bf16.msra.mxu0 %v1052
    %1075 = vmatprep.subr.bf16.mxu0 0
    %1076 = vmatpush1.bf16.msra.mxu0 %v1053
    %1077 = vmatprep.subr.bf16.mxu0 0
    %1078 = vmatpush1.bf16.msra.mxu0 %v1054
    %1079 = vmatprep.subr.bf16.mxu0 0
    %1080 = vmatpush1.bf16.msra.mxu0 0
    %1081 = vmatprep.subr.bf16.mxu0 0
    %1082 = vmatpush1.bf16.msra.mxu0 0
    %1083 = vmatprep.subr.bf16.mxu0 0
    %1084 = vmatpush1.bf16.msra.mxu0 0
    %1085 = vmatprep.subr.bf16.mxu0 0
    %1086 = vmatpush1.bf16.msra.mxu0 0
    %1087 = vmatprep.subr.bf16.mxu0 0
    %1088 = vmatpush1.bf16.msra.mxu0 0
    %1089 = vmatprep.subr.bf16.mxu0 0
    %1090 = vmatpush1.bf16.msra.mxu0 0
    %1091 = vmatprep.subr.bf16.mxu0 0
    %1092 = vmatpush1.bf16.msra.mxu0 0
    %1093 = vmatprep.subr.bf16.mxu0 0
    %1094 = vmatpush1.bf16.msra.mxu0 0
    %1095 = vmatprep.mubr.bf16.mxu0 0
    %1096 = vmatmul.mubr.bf16.gmra.mrb[0].mxu0 %v997
    %v1097 = vpop.f32.mrb[0].mxu0
    %v1098 = vadd.f32 0.0, %v1097
    %v1099 = vpop.f32.mrb[0].mxu0
    %v1100 = vpop.f32.mrb[0].mxu0
    %v1101 = vpop.f32.mrb[0].mxu0
    %1102 = vdwg.mxu0
    %vm1103 = vcmask 23552
    %1104 = vst.msk [vmem:[%s2] sm:$0xff] %vm1103, %v1098
    // Predicated region
    $region14: #{dqn_forward.1} parent=1 // pred_check
      _
    $region15: #{dqn_forward.1} parent=1 // pred_check_branch
      %1106 = sbr.rel (0) target = $region17
    $region16: #{dqn_forward.1} parent=1 // pred_region
      _
    $region17: #{dqn_forward.1} parent=1 // pred_fallthru
      _
    // Predicated region
    $region18: #{dqn_forward.1} parent=1 // pred_check
      _
    $region19: #{dqn_forward.1} parent=1 // pred_check_branch
      %1108 = sbr.rel (0) target = $region21
    $region20: #{dqn_forward.1} parent=1 // pred_region
      _
    $region21: #{dqn_forward.1} parent=1 // pred_fallthru
      _
    %1109 = vsyncpa [#allocation4], 1

</llo_original>
